<compile_context>
chip_gen: v5e
topology: v5e:2x2
jax: 0.10.0
libtpu: 0.0.40
codegen_flags: <defaults>
</compile_context>

<pallas_src>
import functools

import jax
import jax.numpy as jnp
import numpy as np
from jax import lax
from jax.experimental import pallas as pl
from jax.experimental.pallas import tpu as pltpu


def channel_mixing_kernel(x_ref, w_ref, ab_ref, o_ref, *, o_axis, t_out):
    # x_ref : (1, tS, E_in)   token tile, compute dtype (bf16 by default)
    # w_ref : (1, E_in, tO)   fused (static + adaptive) weight tile, [in, out]
    # ab_ref: (1, 1, E_out)   full per-batch adaptive bias (f32), VMEM-resident
    # o_ref : (1, tS, tO)
    y = jnp.dot(x_ref[0], w_ref[0],
                preferred_element_type=jnp.float32)          # MXU, f32 accumulate
    off = pl.multiple_of(pl.program_id(o_axis) * t_out, t_out)
    ab = ab_ref[0, :, pl.ds(off, t_out)]                     # [1, tO] slice of resident bias
    o_ref[0] = (y + ab).astype(o_ref.dtype)


def _pick_tile(dim: int, target: int, granule: int) -> int:
    """Largest multiple of `granule` <= target that divides dim; else the full dim."""
    if dim <= target:
        return dim
    t = (target // granule) * granule
    while t >= granule:
        if dim % t == 0:
            return t
        t -= granule
    return dim  # ragged dim: fall back to a single full-size block


def channel_mixing_pallas(x, adapt_input, params, *, compute_dtype=jnp.bfloat16,
                          out_dtype=None, s_tile=None, o_tile=None):
    B, S, E = x.shape
    A = adapt_input.shape[-1]
    out_dtype = x.dtype if out_dtype is None else out_dtype
    HIGH = lax.Precision.HIGHEST

    W = params["W"].astype(jnp.float32)        # [E_out, E_in]   static weight
    Waw = params["Waw"].astype(jnp.float32)    # [E*E, A]        adapt_weight.weight (flat = o*E + i)
    baw = params["baw"].astype(jnp.float32)    # [E*E]           adapt_weight.bias
    Wab = params["Wab"].astype(jnp.float32)    # [E_out, A]      adapt_bias.weight
    bab = params["bab"].astype(jnp.float32)    # [E_out]         adapt_bias.bias
    adapt = adapt_input.astype(jnp.float32)    # [B, A]

    # --- one-time (constant-foldable) parameter plumbing ---------------------
    # Pre-permute the generator so its GEMM output is already [E_in, E_out]
    # (flat = i*E + o) -> no per-call [B, E, E] transpose on the critical path.
    Waw_io = Waw.reshape(E, E, A).transpose(1, 0, 2).reshape(E * E, A)
    # Static weight with adapt_weight bias folded in, [in, out] layout.
    w_static_t = (W + baw.reshape(E, E)).T                               # [E_in, E_out]

    # --- per-call adaptive precompute: dense XLA MXU GEMMs -------------------
    aw = jnp.dot(adapt, Waw_io.T, precision=HIGH).reshape(B, E, E)       # [B, E_in, E_out]
    # Single fused effective weight, added once in f32, streamed in bf16/f32.
    w_eff = (aw + w_static_t[None]).astype(compute_dtype)                # [B, E_in, E_out]
    ab = (jnp.dot(adapt, Wab.T, precision=HIGH) + bab).reshape(B, 1, E)  # [B, 1, E_out] f32

    x_in = x.astype(compute_dtype)
    in_itemsize = jnp.dtype(compute_dtype).itemsize
    out_itemsize = jnp.dtype(out_dtype).itemsize

    # --- VMEM budget (v7x has only 64 MiB per TensorCore) --------------------
    try:
        phys_vmem = int(pltpu.get_tpu_info().vmem_capacity_bytes)
    except Exception:
        phys_vmem = 64 * 1024 * 1024
    budget = int(0.6 * phys_vmem)

    # --- tiling: lane-dense output; tS grows to the largest VMEM-feasible tile
    tO = _pick_tile(E, 256, 128) if o_tile is None else o_tile
    s_gran = 16 if jnp.dtype(compute_dtype) == jnp.dtype(jnp.bfloat16) else 8
    if s_tile is None:
        tS = None
        for target in (1024, 512, 256, 128, 64, 32, 16, 8):
            cand = _pick_tile(S, target, s_gran)
            need = (2 * (cand * E + E * tO) * in_itemsize
                    + 2 * cand * tO * out_itemsize + 2 * E * 4)
            if need <= budget:
                tS = cand
                break
        if tS is None:
            tS = _pick_tile(S, s_gran, s_gran)
    else:
        tS = s_tile
    n_s, n_o = S // tS, E // tO

    # --- grid order: keep the larger re-fetch stream resident ----------------
    # inner == "s": weight tile resident across the S sweep (x re-fetched n_o times)
    # inner == "o": x tile resident across the O sweep (weight re-fetched n_s times)
    x_refetch = n_o * S * E * in_itemsize
    w_refetch = n_s * E * E * in_itemsize
    inner = "s" if w_refetch >= x_refetch else "o"
    outer = "o" if inner == "s" else "s"
    # Lead with a big axis when B == 1 so both v7x TensorCores get work.
    order = ("b", outer, inner) if B > 1 else (outer, "b", inner)
    sizes = {"b": B, "s": n_s, "o": n_o}
    grid = tuple(sizes[a] for a in order)
    pos = {name: i for i, name in enumerate(order)}

    in_specs = [
        pl.BlockSpec((1, tS, E), lambda *g: (g[pos["b"]], g[pos["s"]], 0)),   # x tokens
        pl.BlockSpec((1, E, tO), lambda *g: (g[pos["b"]], 0, g[pos["o"]])),   # fused weight tile
        pl.BlockSpec((1, 1, E), lambda *g: (g[pos["b"]], 0, 0)),              # resident bias
    ]
    out_specs = pl.BlockSpec((1, tS, tO),
                             lambda *g: (g[pos["b"]], g[pos["s"]], g[pos["o"]]))
    # TODO(synk): sweep pipeline_mode=pl.Buffered(3) on the streamed specs for
    # small-E shapes where per-tile MXU time is too short to hide DMA.

    block_bytes = (2 * (tS * E + E * tO) * in_itemsize
                   + 2 * tS * tO * out_itemsize + 2 * E * 4)
    vmem_limit = int(min(budget, max(32 * 1024 * 1024, 2 * block_bytes)))
    vmem_limit = max(vmem_limit, block_bytes + (4 << 20))

    cost = pl.CostEstimate(
        flops=2 * B * S * E * E + B * S * E,
        transcendentals=0,
        bytes_accessed=(B * S * E * in_itemsize * (n_o if inner == "s" else 1)
                        + B * E * E * in_itemsize * (1 if inner == "s" else n_s)
                        + B * E * 4 + B * S * E * out_itemsize),
    )

    kernel = functools.partial(channel_mixing_kernel, o_axis=pos["o"], t_out=tO)
    return pl.pallas_call(
        kernel,
        out_shape=jax.ShapeDtypeStruct((B, S, E), out_dtype),
        grid_spec=pltpu.PrefetchScalarGridSpec(
            num_scalar_prefetch=0,
            grid=grid,
            in_specs=in_specs,
            out_specs=out_specs),
        compiler_params=pltpu.CompilerParams(
            dimension_semantics=("parallel",) * len(grid),
            vmem_limit_bytes=vmem_limit),
        cost_estimate=cost,
    )(x_in, w_eff, ab)


def channel_mixing_ref(x, adapt_input, params):
    """Pure-JAX reference mirroring the PyTorch forward exactly."""
    B, S, E = x.shape
    A = adapt_input.shape[-1]
    HIGH = lax.Precision.HIGHEST
    xf = x.reshape(B * S, E)
    af = jnp.broadcast_to(adapt_input[:, None, :], (B, S, A)).reshape(B * S, A)
    aw = jnp.dot(af, params["Waw"].T, precision=HIGH) + params["baw"]   # [N, E*E]
    aw = aw.reshape(B * S, E, E)                                        # [N, out, in]
    ab = jnp.dot(af, params["Wab"].T, precision=HIGH) + params["bab"]   # [N, out]
    w = params["W"][None, :, :] + aw                                    # [N, out, in]
    y = jnp.einsum("ni,noi->no", xf, w, precision=HIGH) + ab            # bmm(x[:,None,:], w^T)
    return y.reshape(B, S, E)


if __name__ == "__main__":
    # Small, lane-friendly shapes: batch=2, seq=128, embed=128, adapt_dim=16.
    B, S, E, A = 2, 128, 128, 16

    key = jax.random.PRNGKey(0)
    k_x, k_a, k_w, k_waw, k_baw, k_wab, k_bab = jax.random.split(key, 7)

    x = jax.random.normal(k_x, (B, S, E), dtype=jnp.float32)
    adapt_input = jax.random.normal(k_a, (B, A), dtype=jnp.float32)

    # Deterministic synthetic parameters (shapes per AdaptiveLinear.__init__).
    params = {
        "W": jax.random.normal(k_w, (E, E), dtype=jnp.float32),
        "Waw": jax.random.normal(k_waw, (E * E, A), dtype=jnp.float32) * 0.1,
        "baw": jax.random.normal(k_baw, (E * E,), dtype=jnp.float32) * 0.1,
        "Wab": jax.random.normal(k_wab, (E, A), dtype=jnp.float32) * 0.1,
        "bab": jax.random.normal(k_bab, (E,), dtype=jnp.float32) * 0.1,
        # NOTE: AdaptiveLinear.self.bias exists in __init__ but is unused in forward.
    }

    ref = jax.block_until_ready(channel_mixing_ref(x, adapt_input, params))

    # f32 compute path: tight check.
    out_f32 = jax.block_until_ready(
        channel_mixing_pallas(x, adapt_input, params, compute_dtype=jnp.float32))
    np.testing.assert_allclose(np.asarray(out_f32), np.asarray(ref), rtol=2e-3, atol=2e-3)

    # Default (bf16 streaming) path: looser check, f32 accumulation + f32 bias add inside.
    out_bf16 = jax.block_until_ready(channel_mixing_pallas(x, adapt_input, params))
    np.testing.assert_allclose(np.asarray(out_bf16), np.asarray(ref), rtol=5e-2, atol=5e-1)

    print("KERNEL_OK")
</pallas_src>

<mosaic_0001>
module attributes {stable_mosaic.version = 11 : i64} {
  func.func @channel_mixing_kernel(%arg0: i32, %arg1: i32, %arg2: i32, %arg3: memref<1x128x128xf32, #tpu.memory_space<vmem>>, %arg4: memref<1x128x128xf32, #tpu.memory_space<vmem>>, %arg5: memref<1x1x128xf32, #tpu.memory_space<vmem>>, %arg6: memref<1x128x128xf32, #tpu.memory_space<vmem>>) attributes {dimension_semantics = [#tpu.dimension_semantics<parallel>, #tpu.dimension_semantics<parallel>, #tpu.dimension_semantics<parallel>], iteration_bounds = array<i64: 2, 1, 1>, scalar_prefetch = 0 : i64, scratch_operands = 0 : i64, tpu.core_type = #tpu.core_type<tc>, window_params = [{transform_indices = @transform_0, window_bounds = array<i64: 1, 128, 128>}, {transform_indices = @transform_1, window_bounds = array<i64: 1, 128, 128>}, {transform_indices = @transform_2, window_bounds = array<i64: 1, 1, 128>}, {transform_indices = @transform_3, window_bounds = array<i64: 1, 128, 128>}]} {
    %c0 = arith.constant 0 : index
    %c0_0 = arith.constant 0 : index
    %c0_1 = arith.constant 0 : index
    %0 = vector.load %arg3[%c0, %c0_0, %c0_1] : memref<1x128x128xf32, #tpu.memory_space<vmem>>, vector<1x128x128xf32>
    %1 = vector.shape_cast %0 : vector<1x128x128xf32> to vector<128x128xf32>
    %c0_2 = arith.constant 0 : index
    %c0_3 = arith.constant 0 : index
    %c0_4 = arith.constant 0 : index
    %2 = vector.load %arg4[%c0_2, %c0_3, %c0_4] : memref<1x128x128xf32, #tpu.memory_space<vmem>>, vector<1x128x128xf32>
    %3 = vector.shape_cast %2 : vector<1x128x128xf32> to vector<128x128xf32>
    %cst = arith.constant dense<0.000000e+00> : vector<128x128xf32>
    %4 = tpu.matmul %1, %3, %cst {dimension_numbers = #tpu.dot_dimension_numbers<[1], [0], [0], [1], [0, 0, 1, 1], [], []>} : vector<128x128xf32>, vector<128x128xf32>, vector<128x128xf32> -> vector<128x128xf32>
    %c128_i32 = arith.constant 128 : i32
    %5 = arith.muli %arg1, %c128_i32 : i32
    %6 = tpu.assume_multiple %5, 128 : i32
    %c0_5 = arith.constant 0 : index
    %c0_6 = arith.constant 0 : index
    %7 = arith.index_cast %6 : i32 to index
    %8 = vector.load %arg5[%c0_5, %c0_6, %7] : memref<1x1x128xf32, #tpu.memory_space<vmem>>, vector<1x1x128xf32>
    %9 = vector.shape_cast %8 : vector<1x1x128xf32> to vector<1x128xf32>
    %10 = vector.broadcast %9 : vector<1x128xf32> to vector<128x128xf32>
    %11 = arith.addf %4, %10 : vector<128x128xf32>
    %c0_7 = arith.constant 0 : index
    %c0_8 = arith.constant 0 : index
    %c0_9 = arith.constant 0 : index
    %12 = vector.load %arg6[%c0_7, %c0_8, %c0_9] : memref<1x128x128xf32, #tpu.memory_space<vmem>>, vector<1x128x128xf32>
    %13 = vector.shape_cast %12 : vector<1x128x128xf32> to vector<128x128xf32>
    %14 = vector.shape_cast %11 : vector<128x128xf32> to vector<1x128x128xf32>
    tpu.vector_store %arg6[%c0_7, %c0_8, %c0_9], %14 {strides = array<i32>} : memref<1x128x128xf32, #tpu.memory_space<vmem>>, vector<1x128x128xf32>,
    return
  }
  func.func @transform_0(%arg0: i32, %arg1: i32, %arg2: i32) -> (i32, i32, i32) {
    %c0_i32 = arith.constant 0 : i32
    %c0_i32_0 = arith.constant 0 : i32
    return %arg0, %arg2, %c0_i32 : i32, i32, i32
  }
  func.func @transform_1(%arg0: i32, %arg1: i32, %arg2: i32) -> (i32, i32, i32) {
    %c0_i32 = arith.constant 0 : i32
    %c0_i32_0 = arith.constant 0 : i32
    return %arg0, %c0_i32, %arg1 : i32, i32, i32
  }
  func.func @transform_2(%arg0: i32, %arg1: i32, %arg2: i32) -> (i32, i32, i32) {
    %c0_i32 = arith.constant 0 : i32
    %c0_i32_0 = arith.constant 0 : i32
    %c0_i32_1 = arith.constant 0 : i32
    return %arg0, %c0_i32, %c0_i32_0 : i32, i32, i32
  }
  func.func @transform_3(%arg0: i32, %arg1: i32, %arg2: i32) -> (i32, i32, i32) {
    %c0_i32 = arith.constant 0 : i32
    return %arg0, %arg2, %arg1 : i32, i32, i32
  }
}

</mosaic_0001>

<llo_original>
// kernel: tpu_custom_call.1
$region0: #{tpu_custom_call.1}
  #allocation0 [shape = 'u32[]', space=smem, size = 0x4, offset = 0x4, fixed_abs, tag = 'smem constant byte address 0x4 - core index']
  #allocation1 [shape = 'u32[72,128]{1,0:T(1,128)}', space=vmem, size = 0x9000, scoped, tag = 'internal scratch']
  %s0 = inlined_call_operand.hbm [shape: f32[2,128,128], index: 0, kind: input, shape index: {}]
  %s1 = inlined_call_operand.hbm [shape: f32[2,128,128], index: 1, kind: input, shape index: {}]
  %s2 = inlined_call_operand.hbm [shape: f32[2,1,128], index: 2, kind: input, shape index: {}]
  %s3 = inlined_call_operand.hbm [shape: f32[2,128,128], index: 3, kind: output, shape index: {}]
  %s4 = sld [smem:[#allocation0]]
  $region57: #{tpu_custom_call.1} parent=0
    _
  %s6 = ssub.s32 1, %s4
  %s7 = scalar_select 0, %s6, %s4
  $region1: #{tpu_custom_call.1} parent=0
    #allocation2 [shape = 'u8[131072]{0}', space=vmem, size = 0x20000, scoped, tag = 'input window, operand 0']
    #allocation3 [shape = 's32[2]{0}', space=sflag, size = 0x8, scoped, tag = 'scoped memory for tpu_custom_call.1']
    #allocation4 [shape = 's32[2]{0}', space=sflag, size = 0x8, scoped, tag = 'scoped memory for tpu_custom_call.1']
    #allocation5 [shape = 'u8[131072]{0}', space=vmem, size = 0x20000, scoped, tag = 'input window, operand 1']
    #allocation6 [shape = 's32[2]{0}', space=sflag, size = 0x8, scoped, tag = 'scoped memory for tpu_custom_call.1']
    #allocation7 [shape = 'u8[1024]{0}', space=vmem, size = 0x400, scoped, tag = 'input window, operand 2']
    #allocation8 [shape = 'u8[131072]{0}', space=vmem, size = 0x20000, scoped, tag = 'output window, operand 0']
    %8 = vsyncpa [#allocation3], 0
    %s9 = scalar_lea.sflag [#allocation3], 1
    %10 = vsyncpa %s9, 0
    %11 = vsyncpa [#allocation6], 0
    %s12 = scalar_lea.sflag [#allocation6], 1
    %13 = vsyncpa %s12, 0
    %14 = vsyncpa [#allocation4], 0
    %s15 = scalar_lea.sflag [#allocation4], 1
    %16 = vsyncpa %s15, 0
    loop: start=0, step=1, limit=4
    $region2: #{tpu_custom_call.1} parent=1 // loop_pre_header
      _
    $region3: #{tpu_custom_call.1} parent=1 // loop_header
      %s18 = sphi 0, %s22
      %p19 = scmp.ge.s32.totalorder %s18, 4
      %s25 = sphi 0, %s44
      %s26 = sphi 0, %s40
      %s27 = sphi 0, %s36
      %s28 = sphi 0, %s25
      %s29 = sphi 0, %s26
      %s30 = sphi 0, %s27
      %s31 = sphi 0, %s28
      %s32 = sphi 0, %s29
      %s33 = sphi 0, %s30
      %s49 = sphi 0, %s51
      %s52 = sphi 0, %s49
      %s53 = sphi 0, %s52
      %s69 = sphi 0, %s53
      %s77 = sphi 0, %s79
      %s80 = sphi 0, %s77
      %s81 = sphi 0, %s80
      %s97 = sphi 0, %s81
      %s103 = sphi 0, %s105
      %s106 = sphi 0, %s103
      %s107 = sphi 0, %s106
      %s123 = sphi 0, %s107
      %s133 = sphi 0, %s135
      %s136 = sphi 0, %s133
      %s137 = sphi 0, %s136
      %s153 = sphi 0, %s137
    $region4: #{tpu_custom_call.1} parent=1 // loop_header_branch
      %21 = sbr.rel (%p19) target = $region8
    $region5: #{tpu_custom_call.1} parent=1 // loop_body
      %s23 = ssub.s32 %s18, 1
      %s24 = ssub.s32 %s18, 2
      %s34 = sadd.s32 1, %s27
      %p35 = scmp.ge.s32.totalorder %s34, 1
      %s36 = scalar_select %p35, 0, %s34
      %s37 = sadd.s32 1, %s26
      %s38 = scalar_select %p35, %s37, %s26
      %p39 = scmp.ge.s32.totalorder %s38, 1
      %s40 = scalar_select %p39, 0, %s38
      %s41 = sadd.s32 1, %s25
      %s42 = scalar_select %p39, %s41, %s25
      %p43 = scmp.ge.s32.totalorder %s42, 2
      %s44 = scalar_select %p43, 0, %s42
      %s45 = ssub.s32 %s25, %s44
      %s46 = ssub.s32 %s27, %s36
      %s47 = sor.u32 %s45, %s46
      %p48 = scmp.eq.s32.totalorder %s47, 0
      %s50 = sadd.s32 %s49, 1
      %s51 = scalar_select %p48, %s49, %s50
      %p54 = pneg %p48
      %p55 = scmp.eq.s32.totalorder %s18, 1
      %p56 = por %p54, %p55
      %p57 = scmp.ne.s32.totalorder %s49, %s52
      %p58 = scmp.eq.s32.totalorder %s18, 0
      %p59 = por %p57, %p58
      %p60 = scmp.ne.s32.totalorder %s49, %s52
      %p61 = scmp.eq.s32.totalorder %s23, 1
      %p62 = por %p60, %p61
      %p63 = scmp.ne.s32.totalorder %s52, %s53
      %p64 = scmp.eq.s32.totalorder %s23, 0
      %p65 = por %p63, %p64
      %p66 = scmp.ne.s32.totalorder %s52, %s53
      %p67 = scmp.eq.s32.totalorder %s24, 1
      %p68 = por %p66, %p67
      %p70 = scmp.ne.s32.totalorder %s53, %s69
      %p71 = scmp.eq.s32.totalorder %s24, 0
      %p72 = por %p70, %p71
      %s73 = ssub.s32 %s25, %s44
      %s74 = ssub.s32 %s26, %s40
      %s75 = sor.u32 %s73, %s74
      %p76 = scmp.eq.s32.totalorder %s75, 0
      %s78 = sadd.s32 %s77, 1
      %s79 = scalar_select %p76, %s77, %s78
      %p82 = pneg %p76
      %p83 = scmp.eq.s32.totalorder %s18, 1
      %p84 = por %p82, %p83
      %p85 = scmp.ne.s32.totalorder %s77, %s80
      %p86 = scmp.eq.s32.totalorder %s18, 0
      %p87 = por %p85, %p86
      %p88 = scmp.ne.s32.totalorder %s77, %s80
      %p89 = scmp.eq.s32.totalorder %s23, 1
      %p90 = por %p88, %p89
      %p91 = scmp.ne.s32.totalorder %s80, %s81
      %p92 = scmp.eq.s32.totalorder %s23, 0
      %p93 = por %p91, %p92
      %p94 = scmp.ne.s32.totalorder %s80, %s81
      %p95 = scmp.eq.s32.totalorder %s24, 1
      %p96 = por %p94, %p95
      %p98 = scmp.ne.s32.totalorder %s81, %s97
      %p99 = scmp.eq.s32.totalorder %s24, 0
      %p100 = por %p98, %p99
      %s101 = ssub.s32 %s25, %s44
      %p102 = scmp.eq.s32.totalorder %s101, 0
      %s104 = sadd.s32 %s103, 1
      %s105 = scalar_select %p102, %s103, %s104
      %p108 = pneg %p102
      %p109 = scmp.eq.s32.totalorder %s18, 1
      %p110 = por %p108, %p109
      %p111 = scmp.ne.s32.totalorder %s103, %s106
      %p112 = scmp.eq.s32.totalorder %s18, 0
      %p113 = por %p111, %p112
      %p114 = scmp.ne.s32.totalorder %s103, %s106
      %p115 = scmp.eq.s32.totalorder %s23, 1
      %p116 = por %p114, %p115
      %p117 = scmp.ne.s32.totalorder %s106, %s107
      %p118 = scmp.eq.s32.totalorder %s23, 0
      %p119 = por %p117, %p118
      %p120 = scmp.ne.s32.totalorder %s106, %s107
      %p121 = scmp.eq.s32.totalorder %s24, 1
      %p122 = por %p120, %p121
      %p124 = scmp.ne.s32.totalorder %s107, %s123
      %p125 = scmp.eq.s32.totalorder %s24, 0
      %p126 = por %p124, %p125
      %s127 = ssub.s32 %s25, %s44
      %s128 = ssub.s32 %s27, %s36
      %s129 = sor.u32 %s127, %s128
      %s130 = ssub.s32 %s26, %s40
      %s131 = sor.u32 %s129, %s130
      %p132 = scmp.eq.s32.totalorder %s131, 0
      %s134 = sadd.s32 %s133, 1
      %s135 = scalar_select %p132, %s133, %s134
      %p138 = pneg %p132
      %p139 = scmp.eq.s32.totalorder %s18, 1
      %p140 = por %p138, %p139
      %p141 = scmp.ne.s32.totalorder %s133, %s136
      %p142 = scmp.eq.s32.totalorder %s18, 0
      %p143 = por %p141, %p142
      %p144 = scmp.ne.s32.totalorder %s133, %s136
      %p145 = scmp.eq.s32.totalorder %s23, 1
      %p146 = por %p144, %p145
      %p147 = scmp.ne.s32.totalorder %s136, %s137
      %p148 = scmp.eq.s32.totalorder %s23, 0
      %p149 = por %p147, %p148
      %p150 = scmp.ne.s32.totalorder %s136, %s137
      %p151 = scmp.eq.s32.totalorder %s24, 1
      %p152 = por %p150, %p151
      %p154 = scmp.ne.s32.totalorder %s137, %s153
      %p155 = scmp.eq.s32.totalorder %s24, 0
      %p156 = por %p154, %p155
      %p157 = scmp.le.s32.totalorder 1, %s18
      %p158 = scmp.lt.s32.totalorder %s18, 3
      %p159 = pnand %p157, %p158
      %p160 = pneg %p159
      // Predicated region
      $region9: #{tpu_custom_call.1} parent=5 // pred_check
        _
      $region10: #{tpu_custom_call.1} parent=5 // pred_check_branch
        %162 = sbr.rel (%p159) target = $region12
      $region11: #{tpu_custom_call.1} parent=5 // pred_region
        %s163 = ssub.s32 %s18, 1
      $region12: #{tpu_custom_call.1} parent=5 // pred_fallthru
        _
      %p164 = scmp.lt.s32.totalorder %s18, 2
      // Predicated region
      $region13: #{tpu_custom_call.1} parent=5 // pred_check
        %p165 = pneg %p164
      $region14: #{tpu_custom_call.1} parent=5 // pred_check_branch
        %167 = sbr.rel (%p165) target = $region16
      $region15: #{tpu_custom_call.1} parent=5 // pred_region
        // Predicated region
        $region17: #{tpu_custom_call.1} parent=15 // pred_check
          %p168 = pneg %p59
        $region18: #{tpu_custom_call.1} parent=15 // pred_check_branch
          %170 = sbr.rel (%p168) target = $region20
        $region19: #{tpu_custom_call.1} parent=15 // pred_region
          %s171 = sand.u32 %s49, 1
          %s172 = scalar_lea.sflag [#allocation3], %s171
          %s173 = sand.u32 %s49, 1
          %s174 = smul.addr %s173, 128
          %s175 = scalar_lea.vmem [#allocation2], %s174
          %s176 = smul.u32 16, %s27
          %178 = vsyncadd %s172, 0
          %s179 = smul.addr %s25, 16
          %s180 = sadd.s32 %s176, %s179
          %s181 = smul.addr %s180, 8
          %s182 = scalar_lea.hbm %s0, %s181
          %s183 = sshll.u32 %s182, 4
          %s184 = int_to_ptr.hbm [resolvable:$true] %s183
          %s185 = sshll.u32 %s175, 4
          %s186 = int_to_ptr.vmem [resolvable:$true] %s185
          %191 = dma.hbm_to_vmem [thread:$0]  %s184, 2048, %s186, %s172, 128, 128, 8
        $region20: #{tpu_custom_call.1} parent=15 // pred_fallthru
          _
        // Predicated region
        $region21: #{tpu_custom_call.1} parent=15 // pred_check
          %p192 = pneg %p87
        $region22: #{tpu_custom_call.1} parent=15 // pred_check_branch
          %194 = sbr.rel (%p192) target = $region24
        $region23: #{tpu_custom_call.1} parent=15 // pred_region
          %s195 = sand.u32 %s18, 1
          %s196 = scalar_lea.sflag [#allocation6], %s195
          %s197 = sand.u32 %s77, 1
          %s198 = smul.addr %s197, 128
          %s199 = scalar_lea.vmem [#allocation5], %s198
          %201 = vsyncadd %s196, 0
          %s202 = smul.addr %s25, 16
          %s203 = sadd.s32 %s26, %s202
          %s204 = smul.addr %s203, 8
          %s205 = scalar_lea.hbm %s1, %s204
          %s206 = sshll.u32 %s205, 4
          %s207 = int_to_ptr.hbm [resolvable:$true] %s206
          %s208 = sshll.u32 %s199, 4
          %s209 = int_to_ptr.vmem [resolvable:$true] %s208
          %214 = dma.hbm_to_vmem [thread:$0]  %s207, 2048, %s209, %s196, 128, 128, 8
        $region24: #{tpu_custom_call.1} parent=15 // pred_fallthru
          _
        // Predicated region
        $region25: #{tpu_custom_call.1} parent=15 // pred_check
          %p215 = pneg %p113
        $region26: #{tpu_custom_call.1} parent=15 // pred_check_branch
          %217 = sbr.rel (%p215) target = $region28
        $region27: #{tpu_custom_call.1} parent=15 // pred_region
          %s218 = sand.u32 %s18, 1
          %s219 = scalar_lea.sflag [#allocation6], %s218
          %s220 = sand.u32 %s103, 1
          %s221 = scalar_lea.vmem [#allocation7], %s220
          %223 = vsyncadd %s219, 0
          %s224 = scalar_lea.hbm %s2, %s25
          %s226 = sshll.u32 %s224, 4
          %s227 = int_to_ptr.hbm [resolvable:$true] %s226
          %s228 = sshll.u32 %s221, 4
          %s229 = int_to_ptr.vmem [resolvable:$true] %s228
          %231 = dma.hbm_to_vmem [thread:$0]  %s227, 16, %s229, %s219
        $region28: #{tpu_custom_call.1} parent=15 // pred_fallthru
          _
      $region16: #{tpu_custom_call.1} parent=5 // pred_fallthru
        _
      %p232 = scmp.le.s32.totalorder 1, %s18
      %p233 = scmp.lt.s32.totalorder %s18, 3
      %p234 = pnand %p232, %p233
      %p235 = pneg %p234
      // Predicated region
      $region29: #{tpu_custom_call.1} parent=5 // pred_check
        _
      $region30: #{tpu_custom_call.1} parent=5 // pred_check_branch
        %237 = sbr.rel (%p234) target = $region32
      $region31: #{tpu_custom_call.1} parent=5 // pred_region
        %s238 = ssub.s32 %s18, 1
        %s239 = sand.u32 %s52, 1
        %s240 = scalar_lea.sflag [#allocation3], %s239
        %s241 = sand.u32 %s52, 1
        %s242 = smul.addr %s241, 128
        %s243 = scalar_lea.vmem [#allocation2], %s242
        // Predicated region
        $region33: #{tpu_custom_call.1} parent=31 // pred_check
          %p244 = pneg %p65
        $region34: #{tpu_custom_call.1} parent=31 // pred_check_branch
          %246 = sbr.rel (%p244) target = $region36
        $region35: #{tpu_custom_call.1} parent=31 // pred_region
          %248 = dma.done %s240, 2048
        $region36: #{tpu_custom_call.1} parent=31 // pred_fallthru
          _
        %s249 = sand.u32 %s23, 1
        %s250 = scalar_lea.sflag [#allocation6], %s249
        %s251 = sand.u32 %s80, 1
        %s252 = smul.addr %s251, 128
        %s253 = scalar_lea.vmem [#allocation5], %s252
        // Predicated region
        $region37: #{tpu_custom_call.1} parent=31 // pred_check
          %p254 = pneg %p93
        $region38: #{tpu_custom_call.1} parent=31 // pred_check_branch
          %256 = sbr.rel (%p254) target = $region40
        $region39: #{tpu_custom_call.1} parent=31 // pred_region
          %258 = dma.done %s250, 2048
        $region40: #{tpu_custom_call.1} parent=31 // pred_fallthru
          _
        %s259 = sand.u32 %s23, 1
        %s260 = scalar_lea.sflag [#allocation6], %s259
        %s261 = sand.u32 %s106, 1
        %s262 = scalar_lea.vmem [#allocation7], %s261
        // Predicated region
        $region41: #{tpu_custom_call.1} parent=31 // pred_check
          %p263 = pneg %p119
        $region42: #{tpu_custom_call.1} parent=31 // pred_check_branch
          %265 = sbr.rel (%p263) target = $region44
        $region43: #{tpu_custom_call.1} parent=31 // pred_region
          %267 = dma.done %s260, 16
        $region44: #{tpu_custom_call.1} parent=31 // pred_fallthru
          _
        %s268 = sand.u32 %s52, 1
        %s269 = scalar_lea.sflag [#allocation3], %s268
        %s270 = sand.u32 %s52, 1
        %s271 = smul.addr %s270, 128
        %s272 = scalar_lea.vmem [#allocation2], %s271
        %p273 = pneg %p65
        %p274 = pneg %p62
        %s275 = sand.u32 %s23, 1
        %s276 = scalar_lea.sflag [#allocation6], %s275
        %s277 = sand.u32 %s80, 1
        %s278 = smul.addr %s277, 128
        %s279 = scalar_lea.vmem [#allocation5], %s278
        %p280 = pneg %p93
        %p281 = pneg %p90
        %s282 = sand.u32 %s23, 1
        %s283 = scalar_lea.sflag [#allocation6], %s282
        %s284 = sand.u32 %s106, 1
        %s285 = scalar_lea.vmem [#allocation7], %s284
        %p286 = pneg %p119
        %p287 = pneg %p116
        %p288 = pneg %p149
        %p289 = pneg %p146
        %s290 = sand.u32 %s136, 1
        %s291 = scalar_lea.sflag [#allocation4], %s290
        %s292 = sand.u32 %s136, 1
        %s293 = smul.addr %s292, 128
        %s294 = scalar_lea.vmem [#allocation8], %s293
        %s295 = smul.u32 16, %s30
        %s296 = smul.u32 16, %s30
        %v297 = vld [vmem:[%s243] sm:$0xff]
        %v298 = vld [vmem:[%s243 + $0x8] sm:$0xff]
        %v299 = vld [vmem:[%s243 + $0x10] sm:$0xff]
        %v300 = vld [vmem:[%s243 + $0x18] sm:$0xff]
        %v301 = vld [vmem:[%s243 + $0x20] sm:$0xff]
        %v302 = vld [vmem:[%s243 + $0x28] sm:$0xff]
        %v303 = vld [vmem:[%s243 + $0x30] sm:$0xff]
        %v304 = vld [vmem:[%s243 + $0x38] sm:$0xff]
        %v305 = vld [vmem:[%s243 + $0x40] sm:$0xff]
        %v306 = vld [vmem:[%s243 + $0x48] sm:$0xff]
        %v307 = vld [vmem:[%s243 + $0x50] sm:$0xff]
        %v308 = vld [vmem:[%s243 + $0x58] sm:$0xff]
        %v309 = vld [vmem:[%s243 + $0x60] sm:$0xff]
        %v310 = vld [vmem:[%s243 + $0x68] sm:$0xff]
        %v311 = vld [vmem:[%s243 + $0x70] sm:$0xff]
        %v312 = vld [vmem:[%s243 + $0x78] sm:$0xff]
        %v313 = vld [vmem:[%s253] sm:$0xff]
        %v314 = vld [vmem:[%s253 + $0x8] sm:$0xff]
        %v315 = vld [vmem:[%s253 + $0x10] sm:$0xff]
        %v316 = vld [vmem:[%s253 + $0x18] sm:$0xff]
        %v317 = vld [vmem:[%s253 + $0x20] sm:$0xff]
        %v318 = vld [vmem:[%s253 + $0x28] sm:$0xff]
        %v319 = vld [vmem:[%s253 + $0x30] sm:$0xff]
        %v320 = vld [vmem:[%s253 + $0x38] sm:$0xff]
        %v321 = vld [vmem:[%s253 + $0x40] sm:$0xff]
        %v322 = vld [vmem:[%s253 + $0x48] sm:$0xff]
        %v323 = vld [vmem:[%s253 + $0x50] sm:$0xff]
        %v324 = vld [vmem:[%s253 + $0x58] sm:$0xff]
        %v325 = vld [vmem:[%s253 + $0x60] sm:$0xff]
        %v326 = vld [vmem:[%s253 + $0x68] sm:$0xff]
        %v327 = vld [vmem:[%s253 + $0x70] sm:$0xff]
        %v328 = vld [vmem:[%s253 + $0x78] sm:$0xff]
        %s329 = smul.u32 %s29, 128
        %s330 = sshra.s32 %s329, 7
        %s331 = sand.u32 %s329, 127
        %s332 = scalar_lea.vmem %s262, %s330 [#allocation7]
        %v333 = vld [vmem:[%s332] sm:$0x1]
        %v335 = vperm.slane %v333, 0
        %337 = vmatpush.msra.mxu0 %v328
        %338 = vmatpush.msra.mxu0 %v327
        %339 = vmatpush.msra.mxu0 %v326
        %340 = vmatpush.msra.mxu0 %v325
        %341 = vmatpush.msra.mxu0 %v324
        %342 = vmatpush.msra.mxu0 %v323
        %343 = vmatpush.msra.mxu0 %v322
        %344 = vmatpush.msra.mxu0 %v321
        %345 = vmatpush.msra.mxu0 %v320
        %346 = vmatpush.msra.mxu0 %v319
        %347 = vmatpush.msra.mxu0 %v318
        %348 = vmatpush.msra.mxu0 %v317
        %349 = vmatpush.msra.mxu0 %v316
        %350 = vmatpush.msra.mxu0 %v315
        %351 = vmatpush.msra.mxu0 %v314
        %352 = vmatpush.msra.mxu0 %v313
        %353 = vmatmul.f32.gmra.mxu0 %v297
        %v354 = vpop.f32.mrf.mxu0
        %v355 = vadd.f32 %v335, %v354
        %356 = vmatmul.f32.gmra.mxu0 %v298
        %v357 = vpop.f32.mrf.mxu0
        %v358 = vadd.f32 %v335, %v357
        %359 = vmatmul.f32.gmra.mxu0 %v299
        %v360 = vpop.f32.mrf.mxu0
        %v361 = vadd.f32 %v335, %v360
        %362 = vmatmul.f32.gmra.mxu0 %v300
        %v363 = vpop.f32.mrf.mxu0
        %v364 = vadd.f32 %v335, %v363
        %365 = vmatmul.f32.gmra.mxu0 %v301
        %v366 = vpop.f32.mrf.mxu0
        %v367 = vadd.f32 %v335, %v366
        %368 = vmatmul.f32.gmra.mxu0 %v302
        %v369 = vpop.f32.mrf.mxu0
        %v370 = vadd.f32 %v335, %v369
        %371 = vmatmul.f32.gmra.mxu0 %v303
        %v372 = vpop.f32.mrf.mxu0
        %v373 = vadd.f32 %v335, %v372
        %374 = vmatmul.f32.gmra.mxu0 %v304
        %v375 = vpop.f32.mrf.mxu0
        %v376 = vadd.f32 %v335, %v375
        %377 = vmatmul.f32.gmra.mxu0 %v305
        %v378 = vpop.f32.mrf.mxu0
        %v379 = vadd.f32 %v335, %v378
        %380 = vmatmul.f32.gmra.mxu0 %v306
        %v381 = vpop.f32.mrf.mxu0
        %v382 = vadd.f32 %v335, %v381
        %383 = vmatmul.f32.gmra.mxu0 %v307
        %v384 = vpop.f32.mrf.mxu0
        %v385 = vadd.f32 %v335, %v384
        %386 = vmatmul.f32.gmra.mxu0 %v308
        %v387 = vpop.f32.mrf.mxu0
        %v388 = vadd.f32 %v335, %v387
        %389 = vmatmul.f32.gmra.mxu0 %v309
        %v390 = vpop.f32.mrf.mxu0
        %v391 = vadd.f32 %v335, %v390
        %392 = vmatmul.f32.gmra.mxu0 %v310
        %v393 = vpop.f32.mrf.mxu0
        %v394 = vadd.f32 %v335, %v393
        %395 = vmatmul.f32.gmra.mxu0 %v311
        %v396 = vpop.f32.mrf.mxu0
        %v397 = vadd.f32 %v335, %v396
        %398 = vmatmul.f32.gmra.mxu0 %v312
        %v399 = vpop.f32.mrf.mxu0
        %v400 = vadd.f32 %v335, %v399
        %401 = vdwg.mxu0
        %402 = vst [vmem:[%s294] sm:$0xff] %v355
        %403 = vst [vmem:[%s294 + $0x8] sm:$0xff] %v358
        %404 = vst [vmem:[%s294 + $0x10] sm:$0xff] %v361
        %405 = vst [vmem:[%s294 + $0x18] sm:$0xff] %v364
        %406 = vst [vmem:[%s294 + $0x20] sm:$0xff] %v367
        %407 = vst [vmem:[%s294 + $0x28] sm:$0xff] %v370
        %408 = vst [vmem:[%s294 + $0x30] sm:$0xff] %v373
        %409 = vst [vmem:[%s294 + $0x38] sm:$0xff] %v376
        %410 = vst [vmem:[%s294 + $0x40] sm:$0xff] %v379
        %411 = vst [vmem:[%s294 + $0x48] sm:$0xff] %v382
        %412 = vst [vmem:[%s294 + $0x50] sm:$0xff] %v385
        %413 = vst [vmem:[%s294 + $0x58] sm:$0xff] %v388
        %414 = vst [vmem:[%s294 + $0x60] sm:$0xff] %v391
        %415 = vst [vmem:[%s294 + $0x68] sm:$0xff] %v394
        %416 = vst [vmem:[%s294 + $0x70] sm:$0xff] %v397
        %417 = vst [vmem:[%s294 + $0x78] sm:$0xff] %v400
        %s418 = sand.u32 %s136, 1
        %s419 = scalar_lea.sflag [#allocation4], %s418
        %s420 = sand.u32 %s136, 1
        %s421 = smul.addr %s420, 128
        %s422 = scalar_lea.vmem [#allocation8], %s421
        // Predicated region
        $region45: #{tpu_custom_call.1} parent=31 // pred_check
          %p423 = pneg %p146
        $region46: #{tpu_custom_call.1} parent=31 // pred_check_branch
          %425 = sbr.rel (%p423) target = $region48
        $region47: #{tpu_custom_call.1} parent=31 // pred_region
          %s426 = smul.u32 16, %s30
          %428 = vsyncadd %s419, 0
          %s429 = sadd.s32 %s29, %s426
          %s430 = smul.addr %s28, 16
          %s431 = sadd.s32 %s429, %s430
          %s432 = smul.addr %s431, 8
          %s433 = scalar_lea.hbm %s3, %s432
          %s434 = sshll.u32 %s422, 4
          %s435 = int_to_ptr.vmem [resolvable:$true] %s434
          %s436 = sshll.u32 %s433, 4
          %s437 = int_to_ptr.hbm [resolvable:$true] %s436
          %442 = dma.vmem_to_hbm [thread:$0]  %s435, 2048, %s437, %s419, 128, 128, 8
        $region48: #{tpu_custom_call.1} parent=31 // pred_fallthru
          _
      $region32: #{tpu_custom_call.1} parent=5 // pred_fallthru
        _
      %p443 = scmp.le.s32.totalorder 2, %s18
      // Predicated region
      $region49: #{tpu_custom_call.1} parent=5 // pred_check
        %p444 = pneg %p443
      $region50: #{tpu_custom_call.1} parent=5 // pred_check_branch
        %446 = sbr.rel (%p444) target = $region52
      $region51: #{tpu_custom_call.1} parent=5 // pred_region
        %s447 = ssub.s32 %s18, 2
        // Predicated region
        $region53: #{tpu_custom_call.1} parent=51 // pred_check
          %p448 = pneg %p152
        $region54: #{tpu_custom_call.1} parent=51 // pred_check_branch
          %450 = sbr.rel (%p448) target = $region56
        $region55: #{tpu_custom_call.1} parent=51 // pred_region
          %s451 = sand.u32 %s137, 1
          %s452 = scalar_lea.sflag [#allocation4], %s451
          %s453 = sand.u32 %s137, 1
          %s454 = smul.addr %s453, 128
          %s455 = scalar_lea.vmem [#allocation8], %s454
          %457 = dma.done %s452, 2048
        $region56: #{tpu_custom_call.1} parent=51 // pred_fallthru
          _
      $region52: #{tpu_custom_call.1} parent=5 // pred_fallthru
        _
    $region6: #{tpu_custom_call.1} parent=1 // loop_footer
      %s22 = sadd.s32 1, %s18
    $region7: #{tpu_custom_call.1} parent=1 // loop_footer_branch
      %17 = sbr.rel target = $region3
    $region8: #{tpu_custom_call.1} parent=1 // loop_exit
      _
    %458 = vsyncpa [#allocation3], 1
    %s459 = scalar_lea.sflag [#allocation3], 1
    %460 = vsyncpa %s459, 1
    %461 = vsyncpa [#allocation6], 1
    %s462 = scalar_lea.sflag [#allocation6], 1
    %463 = vsyncpa %s462, 1
    %464 = vsyncpa [#allocation4], 1
    %s465 = scalar_lea.sflag [#allocation4], 1
    %466 = vsyncpa %s465, 1

</llo_original>
